<compile_context>
chip_gen: v6e
topology: v6e:2x2x1
jax: 0.10.0
libtpu: 0.0.40
codegen_flags: <defaults>
</compile_context>

<pallas_src>
import math

import jax
import jax.numpy as jnp
from jax.experimental import pallas as pl
from jax.experimental.pallas import tpu as pltpu

LANE = 128
MAX_TILE_R = 4096   # 4096 x 128 f32 = 2 MiB per stream per buffer
NSPLIT = 2          # independent partial sums; maps to both TCs on v7x


def _cdiv(a, b):
    return -(-a // b)


def _round_up(a, m):
    return _cdiv(a, m) * m


def _make_kernel(tile_r, steps, total_blocks, rows, needs_mask):
    """Build the per-split partial-sum kernel with static tiling baked in."""

    def kernel(x_ref, t_ref, w_ref, pw_ref, out_ref):
        i = pl.program_id(1)

        @pl.when(i == 0)
        def _():
            out_ref[...] = jnp.zeros_like(out_ref)

        x = x_ref[...].astype(jnp.float32)
        t = t_ref[...].astype(jnp.float32)
        w = w_ref[...].astype(jnp.float32)
        pw = pw_ref[...].astype(jnp.float32)   # broadcasts over the lane axis

        # PyTorch's numerically-stable BCE-with-logits:
        #   log_weight = 1 + (pos_weight - 1) * target
        #   loss       = (1 - t) * x + log_weight * softplus(-x)
        #   loss      *= weight
        # softplus(-x) = max(-x, 0) + log1p(exp(-|x|))  -> only 2 EUP ops.
        log_weight = 1.0 + (pw - 1.0) * t
        softplus_neg_x = jnp.maximum(-x, 0.0) + jnp.log1p(jnp.exp(-jnp.abs(x)))
        elem = ((1.0 - t) * x + log_weight * softplus_neg_x) * w

        if needs_mask:
            # Mask the ragged tail / duplicated boundary block. `rows`,
            # `steps`, `tile_r` are compile-time constants (static shapes),
            # so no scalar prefetch is needed. The jnp.where selection also
            # neutralizes any garbage (NaN/Inf) in the partial boundary block.
            s = pl.program_id(0)
            b = s * steps + i                       # logical (unclamped) block
            row = jax.lax.broadcasted_iota(jnp.int32, (tile_r, 1), 0)
            valid = (b * tile_r + row) < rows
            elem = jnp.where(valid, elem, 0.0)

        # Vector accumulation: vreg-group adds only (pure VPU, no per-step
        # cross-lane reduce). tile_r is a multiple of 8 so this reshape is a
        # layout-preserving view.
        partial = jnp.sum(elem.reshape(-1, 8, LANE), axis=0)     # (8, 128)
        out_ref[...] += partial[None, :, :]

    return kernel


def seg_loss(input_, target, weight, pos_weight, scaler, *, focal=True, gamma=2.0):
    """Pallas implementation of SEGLoss.forward.

    input_, target, weight : same-shaped float arrays (NCHW expected).
    pos_weight             : scalar, [C] per-channel, or broadcastable shape.
    scaler                 : python/np scalar or 0-d array.
    Returns a float32 scalar.
    """
    input_ = jnp.asarray(input_)
    target = jnp.asarray(target)
    weight = jnp.asarray(weight)

    shape = input_.shape
    ndim = input_.ndim
    total = int(math.prod(shape)) if shape else 1
    C = int(shape[1]) if ndim >= 2 else 1
    HW = int(math.prod(shape[2:])) if ndim >= 2 else 1

    # Lane-dense [rows, 128] view. When total % 128 == 0 (the common case for
    # NCHW segmentation tensors) this is a free reshape: no HBM pad pass.
    lane_pad = (-total) % LANE
    rows = (total + lane_pad) // LANE

    def flat2d(a, pad_value):
        f = a.reshape(-1)
        if lane_pad:
            # TODO(synk): rare total % 128 != 0 case still re-materialises the
            # stream via jnp.pad (<=127 pad elements); an ANY-memory manual-DMA
            # path would avoid it but is not worth the complexity here.
            f = jnp.pad(f, (0, lane_pad), constant_values=pad_value)
        return f.reshape(rows, LANE)

    x2 = flat2d(input_, 0)
    t2 = flat2d(target, 0)
    w2 = flat2d(weight, 0)          # zero-padded weight masks the sub-row tail

    # pos_weight: keep it off the HBM fast path.  Per-channel ([C] / [1] /
    # scalar) with lane-aligned channels -> tiny (rows, 1) per-row stream.
    pw = jnp.asarray(pos_weight, jnp.float32)
    per_channel = pw.ndim <= 1 and pw.size in (1, C)
    row_aligned = (HW % LANE == 0) or C == 1 or pw.size == 1
    if per_channel and row_aligned:
        pw_c = jnp.broadcast_to(pw.reshape(-1), (C,))
        row_ids = jnp.arange(rows, dtype=jnp.int32)
        if C > 1 and HW % LANE == 0:
            row_chan = (row_ids // (HW // LANE)) % C
        else:
            row_chan = jnp.zeros_like(row_ids)
        pw2 = pw_c[row_chan].reshape(rows, 1)
    else:
        # General fallback: fully broadcast pos_weight (one extra HBM stream).
        if pw.ndim == 1 and pw.size == C and ndim >= 2:
            pw = pw.reshape((1, C) + (1,) * (ndim - 2))
        pw2 = flat2d(jnp.broadcast_to(pw, shape).astype(jnp.float32), 1.0)

    pw_lanes = pw2.shape[1]

    # Tiling: big row tiles, split into NSPLIT independent partial sums.
    tile_r = max(8, min(MAX_TILE_R, _round_up(_cdiv(rows, NSPLIT), 8)))
    total_blocks = _cdiv(rows, tile_r)          # every block start < rows
    nsplit = NSPLIT if total_blocks >= NSPLIT else 1
    steps = _cdiv(total_blocks, nsplit)
    needs_mask = (total_blocks * tile_r != rows) or (nsplit * steps != total_blocks)
    last_block = total_blocks - 1

    def row_map(s, i):
        # Clamp to the last valid block so no DMA window starts out of bounds;
        # duplicated / partial blocks are zeroed by the in-kernel row mask.
        return (jnp.minimum(s * steps + i, last_block), 0)

    data_spec = pl.BlockSpec((tile_r, LANE), row_map)
    pw_spec = pl.BlockSpec((tile_r, pw_lanes), row_map)

    kernel = _make_kernel(tile_r, steps, total_blocks, rows, needs_mask)

    partials = pl.pallas_call(
        kernel,
        out_shape=jax.ShapeDtypeStruct((nsplit, 8, LANE), jnp.float32),
        grid_spec=pltpu.PrefetchScalarGridSpec(
            num_scalar_prefetch=0,
            grid=(nsplit, steps),
            in_specs=[data_spec, data_spec, data_spec, pw_spec],
            out_specs=pl.BlockSpec((1, 8, LANE), lambda s, i: (s, 0, 0)),
        ),
        compiler_params=pltpu.CompilerParams(
            dimension_semantics=("parallel", "arbitrary"),
            vmem_limit_bytes=48 * 1024 * 1024),
    )(x2, t2, w2, pw2)

    # Final cross-lane reduce + focal + scaler (tiny, done once in the wrapper).
    loss = jnp.sum(partials)
    if focal:
        # NOTE: matches the PyTorch module exactly — exp(-loss) on the
        # SUM-reduced loss (for large losses the focal factor saturates to 1).
        p_t = jnp.exp(-loss)
        loss = (1.0 - p_t) ** gamma * loss
    return loss / jnp.asarray(scaler, jnp.float32)


def seg_loss_ref(input_, target, weight, pos_weight, scaler, *, focal=True, gamma=2.0):
    """Pure-JAX reference (mirrors torch F.binary_cross_entropy_with_logits)."""
    x = jnp.asarray(input_, jnp.float32)
    t = jnp.asarray(target, jnp.float32)
    w = jnp.asarray(weight, jnp.float32)
    pw = jnp.asarray(pos_weight, jnp.float32)
    if pw.ndim == 1 and x.ndim >= 2 and pw.size == x.shape[1]:
        pw = pw.reshape((1, -1) + (1,) * (x.ndim - 2))
    lw = 1.0 + (pw - 1.0) * t
    m = jnp.maximum(-x, 0.0)
    sp = jnp.log(jnp.exp(-m) + jnp.exp(-x - m)) + m
    loss = jnp.sum(((1.0 - t) * x + lw * sp) * w)
    if focal:
        p_t = jnp.exp(-loss)
        loss = (1.0 - p_t) ** gamma * loss
    return loss / jnp.asarray(scaler, jnp.float32)


if __name__ == "__main__":
    key = jax.random.PRNGKey(0)
    k1, k2, k3, k4 = jax.random.split(key, 4)

    B, C, H, W = 2, 4, 16, 16
    input_ = jax.random.normal(k1, (B, C, H, W), jnp.float32)
    target = (jax.random.uniform(k2, (B, C, H, W)) > 0.5).astype(jnp.float32)
    weight = jax.random.uniform(k3, (B, C, H, W), jnp.float32) + 0.5
    pos_weight = jax.random.uniform(k4, (C,), jnp.float32) + 0.5
    scaler = 7.0

    out = seg_loss(input_, target, weight, pos_weight, scaler,
                   focal=True, gamma=2.0)
    out = jax.block_until_ready(out)

    ref = seg_loss_ref(input_, target, weight, pos_weight, scaler,
                       focal=True, gamma=2.0)
    assert jnp.allclose(out, ref, rtol=1e-5, atol=1e-4), (out, ref)
    print("KERNEL_OK")
</pallas_src>

<mosaic_0001>
module attributes {stable_mosaic.version = 11 : i64} {
  func.func @kernel(%arg0: i32, %arg1: i32, %arg2: memref<8x128xf32, #tpu.memory_space<vmem>>, %arg3: memref<8x128xf32, #tpu.memory_space<vmem>>, %arg4: memref<8x128xf32, #tpu.memory_space<vmem>>, %arg5: memref<8x1xf32, #tpu.memory_space<vmem>>, %arg6: memref<1x8x128xf32, #tpu.memory_space<vmem>>) attributes {dimension_semantics = [#tpu.dimension_semantics<parallel>, #tpu.dimension_semantics<arbitrary>], iteration_bounds = array<i64: 2, 1>, scalar_prefetch = 0 : i64, scratch_operands = 0 : i64, tpu.core_type = #tpu.core_type<tc>, window_params = [{transform_indices = @transform_0, window_bounds = array<i64: 8, 128>}, {transform_indices = @transform_1, window_bounds = array<i64: 8, 128>}, {transform_indices = @transform_2, window_bounds = array<i64: 8, 128>}, {transform_indices = @transform_3, window_bounds = array<i64: 8, 1>}, {transform_indices = @transform_4, window_bounds = array<i64: 1, 8, 128>}]} {
    %c0_i32 = arith.constant 0 : i32
    %0 = arith.cmpi eq, %arg1, %c0_i32 : i32
    %1 = arith.extui %0 : i1 to i32
    %c0_i32_0 = arith.constant 0 : i32
    %2 = arith.cmpi ne, %1, %c0_i32_0 : i32
    scf.if %2 {
      %cst_20 = arith.constant 0.000000e+00 : f32
      %35 = vector.broadcast %cst_20 : f32 to vector<1x8x128xf32>
      %c0_21 = arith.constant 0 : index
      %c0_22 = arith.constant 0 : index
      %c0_23 = arith.constant 0 : index
      %36 = vector.load %arg6[%c0_21, %c0_22, %c0_23] : memref<1x8x128xf32, #tpu.memory_space<vmem>>, vector<1x8x128xf32>
      tpu.vector_store %arg6[%c0_21, %c0_22, %c0_23], %35 {strides = array<i32>} : memref<1x8x128xf32, #tpu.memory_space<vmem>>, vector<1x8x128xf32>,
    } else {
    }
    %c0 = arith.constant 0 : index
    %c0_1 = arith.constant 0 : index
    %3 = vector.load %arg2[%c0, %c0_1] : memref<8x128xf32, #tpu.memory_space<vmem>>, vector<8x128xf32>
    %c0_2 = arith.constant 0 : index
    %c0_3 = arith.constant 0 : index
    %4 = vector.load %arg3[%c0_2, %c0_3] : memref<8x128xf32, #tpu.memory_space<vmem>>, vector<8x128xf32>
    %c0_4 = arith.constant 0 : index
    %c0_5 = arith.constant 0 : index
    %5 = vector.load %arg4[%c0_4, %c0_5] : memref<8x128xf32, #tpu.memory_space<vmem>>, vector<8x128xf32>
    %c0_6 = arith.constant 0 : index
    %c0_7 = arith.constant 0 : index
    %6 = vector.load %arg5[%c0_6, %c0_7] : memref<8x1xf32, #tpu.memory_space<vmem>>, vector<8x1xf32>
    %cst = arith.constant 1.000000e+00 : f32
    %7 = vector.broadcast %cst : f32 to vector<8x1xf32>
    %8 = arith.subf %6, %7 : vector<8x1xf32>
    %9 = vector.broadcast %8 : vector<8x1xf32> to vector<8x128xf32>
    %10 = arith.mulf %9, %4 : vector<8x128xf32>
    %cst_8 = arith.constant 1.000000e+00 : f32
    %11 = vector.broadcast %cst_8 : f32 to vector<8x128xf32>
    %12 = arith.addf %11, %10 : vector<8x128xf32>
    %cst_9 = arith.constant 0.000000e+00 : f32
    %13 = vector.broadcast %cst_9 : f32 to vector<8x128xf32>
    %14 = arith.subf %13, %3 : vector<8x128xf32>
    %cst_10 = arith.constant 0.000000e+00 : f32
    %15 = vector.broadcast %cst_10 : f32 to vector<8x128xf32>
    %16 = arith.maximumf %14, %15 : vector<8x128xf32>
    %17 = math.absf %3 : vector<8x128xf32>
    %cst_11 = arith.constant 0.000000e+00 : f32
    %18 = vector.broadcast %cst_11 : f32 to vector<8x128xf32>
    %19 = arith.subf %18, %17 : vector<8x128xf32>
    %20 = math.exp %19 : vector<8x128xf32>
    %21 = math.log1p %20 : vector<8x128xf32>
    %22 = arith.addf %16, %21 : vector<8x128xf32>
    %cst_12 = arith.constant 1.000000e+00 : f32
    %23 = vector.broadcast %cst_12 : f32 to vector<8x128xf32>
    %24 = arith.subf %23, %4 : vector<8x128xf32>
    %25 = arith.mulf %24, %3 : vector<8x128xf32>
    %26 = arith.mulf %12, %22 : vector<8x128xf32>
    %27 = arith.addf %25, %26 : vector<8x128xf32>
    %28 = arith.mulf %27, %5 : vector<8x128xf32>
    %29 = vector.shape_cast %28 : vector<8x128xf32> to vector<1x8x128xf32>
    %cst_13 = arith.constant dense<0.000000e+00> : vector<8x128xf32>
    %30 = vector.multi_reduction <add>, %29, %cst_13 [0] : vector<1x8x128xf32> to vector<8x128xf32>
    %c0_14 = arith.constant 0 : index
    %c0_15 = arith.constant 0 : index
    %c0_16 = arith.constant 0 : index
    %31 = vector.load %arg6[%c0_14, %c0_15, %c0_16] : memref<1x8x128xf32, #tpu.memory_space<vmem>>, vector<1x8x128xf32>
    %32 = vector.shape_cast %30 : vector<8x128xf32> to vector<1x8x128xf32>
    %33 = arith.addf %31, %32 : vector<1x8x128xf32>
    %c0_17 = arith.constant 0 : index
    %c0_18 = arith.constant 0 : index
    %c0_19 = arith.constant 0 : index
    %34 = vector.load %arg6[%c0_17, %c0_18, %c0_19] : memref<1x8x128xf32, #tpu.memory_space<vmem>>, vector<1x8x128xf32>
    tpu.vector_store %arg6[%c0_17, %c0_18, %c0_19], %33 {strides = array<i32>} : memref<1x8x128xf32, #tpu.memory_space<vmem>>, vector<1x8x128xf32>,
    return
  }
  func.func @transform_0(%arg0: i32, %arg1: i32) -> (i32, i32) {
    %c1_i32 = arith.constant 1 : i32
    %0 = arith.muli %arg0, %c1_i32 : i32
    %1 = arith.addi %0, %arg1 : i32
    %c1_i32_0 = arith.constant 1 : i32
    %2 = arith.minsi %1, %c1_i32_0 : i32
    %c0_i32 = arith.constant 0 : i32
    %c0_i32_1 = arith.constant 0 : i32
    return %2, %c0_i32 : i32, i32
  }
  func.func @transform_1(%arg0: i32, %arg1: i32) -> (i32, i32) {
    %c1_i32 = arith.constant 1 : i32
    %0 = arith.muli %arg0, %c1_i32 : i32
    %1 = arith.addi %0, %arg1 : i32
    %c1_i32_0 = arith.constant 1 : i32
    %2 = arith.minsi %1, %c1_i32_0 : i32
    %c0_i32 = arith.constant 0 : i32
    %c0_i32_1 = arith.constant 0 : i32
    return %2, %c0_i32 : i32, i32
  }
  func.func @transform_2(%arg0: i32, %arg1: i32) -> (i32, i32) {
    %c1_i32 = arith.constant 1 : i32
    %0 = arith.muli %arg0, %c1_i32 : i32
    %1 = arith.addi %0, %arg1 : i32
    %c1_i32_0 = arith.constant 1 : i32
    %2 = arith.minsi %1, %c1_i32_0 : i32
    %c0_i32 = arith.constant 0 : i32
    %c0_i32_1 = arith.constant 0 : i32
    return %2, %c0_i32 : i32, i32
  }
  func.func @transform_3(%arg0: i32, %arg1: i32) -> (i32, i32) {
    %c1_i32 = arith.constant 1 : i32
    %0 = arith.muli %arg0, %c1_i32 : i32
    %1 = arith.addi %0, %arg1 : i32
    %c1_i32_0 = arith.constant 1 : i32
    %2 = arith.minsi %1, %c1_i32_0 : i32
    %c0_i32 = arith.constant 0 : i32
    %c0_i32_1 = arith.constant 0 : i32
    return %2, %c0_i32 : i32, i32
  }
  func.func @transform_4(%arg0: i32, %arg1: i32) -> (i32, i32, i32) {
    %c0_i32 = arith.constant 0 : i32
    %c0_i32_0 = arith.constant 0 : i32
    %c0_i32_1 = arith.constant 0 : i32
    return %arg0, %c0_i32, %c0_i32_0 : i32, i32, i32
  }
}

</mosaic_0001>

<llo_original>
// kernel: tpu_custom_call.1
$region0: #{tpu_custom_call.1}
  #allocation0 [shape = 'u32[]', space=smem, size = 0x4, offset = 0x4, fixed_abs, tag = 'smem constant byte address 0x4 - core index']
  #allocation1 [shape = 'u32[144,128]{1,0:T(1,128)}', space=vmem, size = 0x12000, scoped, tag = 'internal scratch']
  %s0 = inlined_call_operand.vmem [shape: f32[16,128], index: 0, kind: input, shape index: {}]
  %s1 = inlined_call_operand.hbm [shape: f32[16,128], index: 1, kind: input, shape index: {}]
  %s2 = inlined_call_operand.hbm [shape: f32[16,128], index: 2, kind: input, shape index: {}]
  %s3 = inlined_call_operand.vmem [shape: f32[16,1], index: 3, kind: input, shape index: {}]
  %s4 = inlined_call_operand.hbm [shape: f32[2,8,128], index: 4, kind: output, shape index: {}]
  %s5 = sld [smem:[#allocation0]]
  $region61: #{tpu_custom_call.1} parent=0
    _
  %s7 = ssub.s32 1, %s5
  %s8 = scalar_select 0, %s7, %s5
  $region1: #{tpu_custom_call.1} parent=0
    #allocation2 [shape = 'u8[8192]{0}', space=vmem, size = 0x2000, scoped, tag = 'input window, operand 1']
    #allocation3 [shape = 's32[2]{0}', space=sflag, size = 0x8, scoped, tag = 'scoped memory for tpu_custom_call.1']
    #allocation4 [shape = 's32[2]{0}', space=sflag, size = 0x8, scoped, tag = 'scoped memory for tpu_custom_call.1']
    #allocation5 [shape = 'u8[8192]{0}', space=vmem, size = 0x2000, scoped, tag = 'input window, operand 2']
    #allocation6 [shape = 's32[2]{0}', space=sflag, size = 0x8, scoped, tag = 'scoped memory for tpu_custom_call.1']
    #allocation7 [shape = 'u8[8192]{0}', space=vmem, size = 0x2000, scoped, tag = 'output window, operand 0']
    %9 = vsyncpa [#allocation3], 0
    %s10 = scalar_lea.sflag [#allocation3], 1
    %11 = vsyncpa %s10, 0
    %12 = vsyncpa [#allocation6], 0
    %s13 = scalar_lea.sflag [#allocation6], 1
    %14 = vsyncpa %s13, 0
    %15 = vsyncpa [#allocation4], 0
    %s16 = scalar_lea.sflag [#allocation4], 1
    %17 = vsyncpa %s16, 0
    loop: start=0, step=1, limit=4
    $region2: #{tpu_custom_call.1} parent=1 // loop_pre_header
      _
    $region3: #{tpu_custom_call.1} parent=1 // loop_header
      %s19 = sphi 0, %s23
      %p20 = scmp.ge.s32.totalorder %s19, 4
      %s26 = sphi 0, %s38
      %s27 = sphi 0, %s34
      %s28 = sphi 0, %s26
      %s29 = sphi 0, %s27
      %s30 = sphi 0, %s28
      %s31 = sphi 0, %s29
      %s47 = sphi 0, %s49
      %s50 = sphi 0, %s47
      %s51 = sphi 0, %s50
      %s67 = sphi 0, %s51
      %s79 = sphi 0, %s81
      %s82 = sphi 0, %s79
      %s83 = sphi 0, %s82
      %s99 = sphi 0, %s83
      %s111 = sphi 0, %s113
      %s114 = sphi 0, %s111
      %s115 = sphi 0, %s114
      %s131 = sphi 0, %s115
      %s143 = sphi 0, %s145
      %s146 = sphi 0, %s143
      %s147 = sphi 0, %s146
      %s163 = sphi 0, %s147
      %s169 = sphi 0, %s171
      %s172 = sphi 0, %s169
      %s173 = sphi 0, %s172
      %s189 = sphi 0, %s173
    $region4: #{tpu_custom_call.1} parent=1 // loop_header_branch
      %22 = sbr.rel (%p20) target = $region8
    $region5: #{tpu_custom_call.1} parent=1 // loop_body
      %s24 = ssub.s32 %s19, 1
      %s25 = ssub.s32 %s19, 2
      %s32 = sadd.s32 1, %s27
      %p33 = scmp.ge.s32.totalorder %s32, 1
      %s34 = scalar_select %p33, 0, %s32
      %s35 = sadd.s32 1, %s26
      %s36 = scalar_select %p33, %s35, %s26
      %p37 = scmp.ge.s32.totalorder %s36, 2
      %s38 = scalar_select %p37, 0, %s36
      %s39 = sadd.s32 %s26, %s27
      %p40 = scmp.lt.s32.totalorder %s39, 1
      %s41 = scalar_select %p40, %s39, 1
      %s42 = sadd.s32 %s38, %s34
      %p43 = scmp.lt.s32.totalorder %s42, 1
      %s44 = scalar_select %p43, %s42, 1
      %s45 = ssub.s32 %s41, %s44
      %p46 = scmp.eq.s32.totalorder %s45, 0
      %s48 = sadd.s32 %s47, 1
      %s49 = scalar_select %p46, %s47, %s48
      %p52 = pneg %p46
      %p53 = scmp.eq.s32.totalorder %s19, 1
      %p54 = por %p52, %p53
      %p55 = scmp.ne.s32.totalorder %s47, %s50
      %p56 = scmp.eq.s32.totalorder %s19, 0
      %p57 = por %p55, %p56
      %p58 = scmp.ne.s32.totalorder %s47, %s50
      %p59 = scmp.eq.s32.totalorder %s24, 1
      %p60 = por %p58, %p59
      %p61 = scmp.ne.s32.totalorder %s50, %s51
      %p62 = scmp.eq.s32.totalorder %s24, 0
      %p63 = por %p61, %p62
      %p64 = scmp.ne.s32.totalorder %s50, %s51
      %p65 = scmp.eq.s32.totalorder %s25, 1
      %p66 = por %p64, %p65
      %p68 = scmp.ne.s32.totalorder %s51, %s67
      %p69 = scmp.eq.s32.totalorder %s25, 0
      %p70 = por %p68, %p69
      %s71 = sadd.s32 %s26, %s27
      %p72 = scmp.lt.s32.totalorder %s71, 1
      %s73 = scalar_select %p72, %s71, 1
      %s74 = sadd.s32 %s38, %s34
      %p75 = scmp.lt.s32.totalorder %s74, 1
      %s76 = scalar_select %p75, %s74, 1
      %s77 = ssub.s32 %s73, %s76
      %p78 = scmp.eq.s32.totalorder %s77, 0
      %s80 = sadd.s32 %s79, 1
      %s81 = scalar_select %p78, %s79, %s80
      %p84 = pneg %p78
      %p85 = scmp.eq.s32.totalorder %s19, 1
      %p86 = por %p84, %p85
      %p87 = scmp.ne.s32.totalorder %s79, %s82
      %p88 = scmp.eq.s32.totalorder %s19, 0
      %p89 = por %p87, %p88
      %p90 = scmp.ne.s32.totalorder %s79, %s82
      %p91 = scmp.eq.s32.totalorder %s24, 1
      %p92 = por %p90, %p91
      %p93 = scmp.ne.s32.totalorder %s82, %s83
      %p94 = scmp.eq.s32.totalorder %s24, 0
      %p95 = por %p93, %p94
      %p96 = scmp.ne.s32.totalorder %s82, %s83
      %p97 = scmp.eq.s32.totalorder %s25, 1
      %p98 = por %p96, %p97
      %p100 = scmp.ne.s32.totalorder %s83, %s99
      %p101 = scmp.eq.s32.totalorder %s25, 0
      %p102 = por %p100, %p101
      %s103 = sadd.s32 %s26, %s27
      %p104 = scmp.lt.s32.totalorder %s103, 1
      %s105 = scalar_select %p104, %s103, 1
      %s106 = sadd.s32 %s38, %s34
      %p107 = scmp.lt.s32.totalorder %s106, 1
      %s108 = scalar_select %p107, %s106, 1
      %s109 = ssub.s32 %s105, %s108
      %p110 = scmp.eq.s32.totalorder %s109, 0
      %s112 = sadd.s32 %s111, 1
      %s113 = scalar_select %p110, %s111, %s112
      %p116 = pneg %p110
      %p117 = scmp.eq.s32.totalorder %s19, 1
      %p118 = por %p116, %p117
      %p119 = scmp.ne.s32.totalorder %s111, %s114
      %p120 = scmp.eq.s32.totalorder %s19, 0
      %p121 = por %p119, %p120
      %p122 = scmp.ne.s32.totalorder %s111, %s114
      %p123 = scmp.eq.s32.totalorder %s24, 1
      %p124 = por %p122, %p123
      %p125 = scmp.ne.s32.totalorder %s114, %s115
      %p126 = scmp.eq.s32.totalorder %s24, 0
      %p127 = por %p125, %p126
      %p128 = scmp.ne.s32.totalorder %s114, %s115
      %p129 = scmp.eq.s32.totalorder %s25, 1
      %p130 = por %p128, %p129
      %p132 = scmp.ne.s32.totalorder %s115, %s131
      %p133 = scmp.eq.s32.totalorder %s25, 0
      %p134 = por %p132, %p133
      %s135 = sadd.s32 %s26, %s27
      %p136 = scmp.lt.s32.totalorder %s135, 1
      %s137 = scalar_select %p136, %s135, 1
      %s138 = sadd.s32 %s38, %s34
      %p139 = scmp.lt.s32.totalorder %s138, 1
      %s140 = scalar_select %p139, %s138, 1
      %s141 = ssub.s32 %s137, %s140
      %p142 = scmp.eq.s32.totalorder %s141, 0
      %s144 = sadd.s32 %s143, 1
      %s145 = scalar_select %p142, %s143, %s144
      %p148 = pneg %p142
      %p149 = scmp.eq.s32.totalorder %s19, 1
      %p150 = por %p148, %p149
      %p151 = scmp.ne.s32.totalorder %s143, %s146
      %p152 = scmp.eq.s32.totalorder %s19, 0
      %p153 = por %p151, %p152
      %p154 = scmp.ne.s32.totalorder %s143, %s146
      %p155 = scmp.eq.s32.totalorder %s24, 1
      %p156 = por %p154, %p155
      %p157 = scmp.ne.s32.totalorder %s146, %s147
      %p158 = scmp.eq.s32.totalorder %s24, 0
      %p159 = por %p157, %p158
      %p160 = scmp.ne.s32.totalorder %s146, %s147
      %p161 = scmp.eq.s32.totalorder %s25, 1
      %p162 = por %p160, %p161
      %p164 = scmp.ne.s32.totalorder %s147, %s163
      %p165 = scmp.eq.s32.totalorder %s25, 0
      %p166 = por %p164, %p165
      %s167 = ssub.s32 %s26, %s38
      %p168 = scmp.eq.s32.totalorder %s167, 0
      %s170 = sadd.s32 %s169, 1
      %s171 = scalar_select %p168, %s169, %s170
      %p174 = pneg %p168
      %p175 = scmp.eq.s32.totalorder %s19, 1
      %p176 = por %p174, %p175
      %p177 = scmp.ne.s32.totalorder %s169, %s172
      %p178 = scmp.eq.s32.totalorder %s19, 0
      %p179 = por %p177, %p178
      %p180 = scmp.ne.s32.totalorder %s169, %s172
      %p181 = scmp.eq.s32.totalorder %s24, 1
      %p182 = por %p180, %p181
      %p183 = scmp.ne.s32.totalorder %s172, %s173
      %p184 = scmp.eq.s32.totalorder %s24, 0
      %p185 = por %p183, %p184
      %p186 = scmp.ne.s32.totalorder %s172, %s173
      %p187 = scmp.eq.s32.totalorder %s25, 1
      %p188 = por %p186, %p187
      %p190 = scmp.ne.s32.totalorder %s173, %s189
      %p191 = scmp.eq.s32.totalorder %s25, 0
      %p192 = por %p190, %p191
      %p193 = scmp.le.s32.totalorder 1, %s19
      %p194 = scmp.lt.s32.totalorder %s19, 3
      %p195 = pnand %p193, %p194
      %p196 = pneg %p195
      // Predicated region
      $region9: #{tpu_custom_call.1} parent=5 // pred_check
        _
      $region10: #{tpu_custom_call.1} parent=5 // pred_check_branch
        %198 = sbr.rel (%p195) target = $region12
      $region11: #{tpu_custom_call.1} parent=5 // pred_region
        %s199 = ssub.s32 %s19, 1
      $region12: #{tpu_custom_call.1} parent=5 // pred_fallthru
        _
      %p200 = scmp.lt.s32.totalorder %s19, 2
      // Predicated region
      $region13: #{tpu_custom_call.1} parent=5 // pred_check
        %p201 = pneg %p200
      $region14: #{tpu_custom_call.1} parent=5 // pred_check_branch
        %203 = sbr.rel (%p201) target = $region16
      $region15: #{tpu_custom_call.1} parent=5 // pred_region
        // Predicated region
        $region17: #{tpu_custom_call.1} parent=15 // pred_check
          %p204 = pneg %p57
        $region18: #{tpu_custom_call.1} parent=15 // pred_check_branch
          %206 = sbr.rel (%p204) target = $region20
        $region19: #{tpu_custom_call.1} parent=15 // pred_region
          %s207 = sadd.s32 %s26, %s27
          %p208 = scmp.lt.s32.totalorder %s207, 1
          %s209 = scalar_select %p208, %s207, 1
          %p210 = scmp.lt.s32.totalorder %s209, 1
          %s211 = scalar_select %p210, %s209, 1
          %s212 = smul.addr %s211, 8
          %s213 = scalar_lea.vmem %s0, %s212
          %s214 = sadd.s32 %s26, %s27
          %p215 = scmp.lt.s32.totalorder %s214, 1
          %s216 = scalar_select %p215, %s214, 1
        $region20: #{tpu_custom_call.1} parent=15 // pred_fallthru
          _
        // Predicated region
        $region21: #{tpu_custom_call.1} parent=15 // pred_check
          %p217 = pneg %p89
        $region22: #{tpu_custom_call.1} parent=15 // pred_check_branch
          %219 = sbr.rel (%p217) target = $region24
        $region23: #{tpu_custom_call.1} parent=15 // pred_region
          %s220 = sand.u32 %s79, 1
          %s221 = scalar_lea.sflag [#allocation3], %s220
          %s222 = sand.u32 %s79, 1
          %s223 = smul.addr %s222, 8
          %s224 = scalar_lea.vmem [#allocation2], %s223
          %s225 = sadd.s32 %s26, %s27
          %p226 = scmp.lt.s32.totalorder %s225, 1
          %s227 = scalar_select %p226, %s225, 1
          %s229 = ssub.s32 128, 128
          %230 = vsyncadd %s221, %s229
          %s231 = smul.addr %s227, 128
          %s232 = scalar_lea.hbm %s1, %s231
          %s234 = sshll.u32 %s224, 4
          %s235 = int_to_ptr.vmem [resolvable:$true] %s234
          %237 = dma.hbm_to_vmem [thread:$0]  %s232, 128, %s235, %s221
        $region24: #{tpu_custom_call.1} parent=15 // pred_fallthru
          _
        // Predicated region
        $region25: #{tpu_custom_call.1} parent=15 // pred_check
          %p238 = pneg %p121
        $region26: #{tpu_custom_call.1} parent=15 // pred_check_branch
          %240 = sbr.rel (%p238) target = $region28
        $region27: #{tpu_custom_call.1} parent=15 // pred_region
          %s241 = sand.u32 %s111, 1
          %s242 = scalar_lea.sflag [#allocation6], %s241
          %s243 = sand.u32 %s111, 1
          %s244 = smul.addr %s243, 8
          %s245 = scalar_lea.vmem [#allocation5], %s244
          %s246 = sadd.s32 %s26, %s27
          %p247 = scmp.lt.s32.totalorder %s246, 1
          %s248 = scalar_select %p247, %s246, 1
          %s250 = ssub.s32 128, 128
          %251 = vsyncadd %s242, %s250
          %s252 = smul.addr %s248, 128
          %s253 = scalar_lea.hbm %s2, %s252
          %s255 = sshll.u32 %s245, 4
          %s256 = int_to_ptr.vmem [resolvable:$true] %s255
          %258 = dma.hbm_to_vmem [thread:$0]  %s253, 128, %s256, %s242
        $region28: #{tpu_custom_call.1} parent=15 // pred_fallthru
          _
        // Predicated region
        $region29: #{tpu_custom_call.1} parent=15 // pred_check
          %p259 = pneg %p153
        $region30: #{tpu_custom_call.1} parent=15 // pred_check_branch
          %261 = sbr.rel (%p259) target = $region32
        $region31: #{tpu_custom_call.1} parent=15 // pred_region
          %s262 = sadd.s32 %s26, %s27
          %p263 = scmp.lt.s32.totalorder %s262, 1
          %s264 = scalar_select %p263, %s262, 1
          %p265 = scmp.lt.s32.totalorder %s264, 1
          %s266 = scalar_select %p265, %s264, 1
          %s267 = smul.addr %s266, 8
          %s268 = scalar_lea.vmem %s3, %s267
          %s269 = sadd.s32 %s26, %s27
          %p270 = scmp.lt.s32.totalorder %s269, 1
          %s271 = scalar_select %p270, %s269, 1
        $region32: #{tpu_custom_call.1} parent=15 // pred_fallthru
          _
      $region16: #{tpu_custom_call.1} parent=5 // pred_fallthru
        _
      %p272 = scmp.le.s32.totalorder 1, %s19
      %p273 = scmp.lt.s32.totalorder %s19, 3
      %p274 = pnand %p272, %p273
      %p275 = pneg %p274
      // Predicated region
      $region33: #{tpu_custom_call.1} parent=5 // pred_check
        _
      $region34: #{tpu_custom_call.1} parent=5 // pred_check_branch
        %277 = sbr.rel (%p274) target = $region36
      $region35: #{tpu_custom_call.1} parent=5 // pred_region
        %s278 = ssub.s32 %s19, 1
        %s279 = sand.u32 %s82, 1
        %s280 = scalar_lea.sflag [#allocation3], %s279
        %s281 = sand.u32 %s82, 1
        %s282 = smul.addr %s281, 8
        %s283 = scalar_lea.vmem [#allocation2], %s282
        // Predicated region
        $region37: #{tpu_custom_call.1} parent=35 // pred_check
          %p284 = pneg %p95
        $region38: #{tpu_custom_call.1} parent=35 // pred_check_branch
          %286 = sbr.rel (%p284) target = $region40
        $region39: #{tpu_custom_call.1} parent=35 // pred_region
          %287 = dma.done %s280, 128
        $region40: #{tpu_custom_call.1} parent=35 // pred_fallthru
          _
        %s288 = sand.u32 %s114, 1
        %s289 = scalar_lea.sflag [#allocation6], %s288
        %s290 = sand.u32 %s114, 1
        %s291 = smul.addr %s290, 8
        %s292 = scalar_lea.vmem [#allocation5], %s291
        // Predicated region
        $region41: #{tpu_custom_call.1} parent=35 // pred_check
          %p293 = pneg %p127
        $region42: #{tpu_custom_call.1} parent=35 // pred_check_branch
          %295 = sbr.rel (%p293) target = $region44
        $region43: #{tpu_custom_call.1} parent=35 // pred_region
          %296 = dma.done %s289, 128
        $region44: #{tpu_custom_call.1} parent=35 // pred_fallthru
          _
        %s297 = sadd.s32 %s28, %s29
        %p298 = scmp.lt.s32.totalorder %s297, 1
        %s299 = scalar_select %p298, %s297, 1
        %p300 = scmp.lt.s32.totalorder %s299, 1
        %s301 = scalar_select %p300, %s299, 1
        %s302 = smul.addr %s301, 8
        %s303 = scalar_lea.vmem %s0, %s302
        %p304 = pneg %p63
        %p305 = pneg %p60
        %s306 = sand.u32 %s82, 1
        %s307 = scalar_lea.sflag [#allocation3], %s306
        %s308 = sand.u32 %s82, 1
        %s309 = smul.addr %s308, 8
        %s310 = scalar_lea.vmem [#allocation2], %s309
        %p311 = pneg %p95
        %p312 = pneg %p92
        %s313 = sand.u32 %s114, 1
        %s314 = scalar_lea.sflag [#allocation6], %s313
        %s315 = sand.u32 %s114, 1
        %s316 = smul.addr %s315, 8
        %s317 = scalar_lea.vmem [#allocation5], %s316
        %p318 = pneg %p127
        %p319 = pneg %p124
        %s320 = sadd.s32 %s28, %s29
        %p321 = scmp.lt.s32.totalorder %s320, 1
        %s322 = scalar_select %p321, %s320, 1
        %p323 = scmp.lt.s32.totalorder %s322, 1
        %s324 = scalar_select %p323, %s322, 1
        %s325 = smul.addr %s324, 8
        %s326 = scalar_lea.vmem %s3, %s325
        %p327 = pneg %p159
        %p328 = pneg %p156
        %p329 = pneg %p185
        %p330 = pneg %p182
        %s331 = sand.u32 %s172, 1
        %s332 = scalar_lea.sflag [#allocation4], %s331
        %s333 = sand.u32 %s172, 1
        %s334 = smul.addr %s333, 8
        %s335 = scalar_lea.vmem [#allocation7], %s334
        %s336 = sadd.s32 %s28, %s29
        %p337 = scmp.lt.s32.totalorder %s336, 1
        %s338 = scalar_select %p337, %s336, 1
        %p339 = scmp.lt.s32.totalorder %s338, 1
        %s340 = scalar_select %p339, %s338, 1
        %s341 = smul.addr %s340, 8
        %s342 = scalar_lea.vmem %s0, %s341
        %s343 = sadd.s32 %s28, %s29
        %p344 = scmp.lt.s32.totalorder %s343, 1
        %s345 = scalar_select %p344, %s343, 1
        %s346 = sadd.s32 %s28, %s29
        %p347 = scmp.lt.s32.totalorder %s346, 1
        %s348 = scalar_select %p347, %s346, 1
        %s349 = sadd.s32 %s28, %s29
        %p350 = scmp.lt.s32.totalorder %s349, 1
        %s351 = scalar_select %p350, %s349, 1
        %s352 = sadd.s32 %s28, %s29
        %p353 = scmp.lt.s32.totalorder %s352, 1
        %s354 = scalar_select %p353, %s352, 1
        %p355 = scmp.lt.s32.totalorder %s354, 1
        %s356 = scalar_select %p355, %s354, 1
        %s357 = smul.addr %s356, 8
        %s358 = scalar_lea.vmem %s3, %s357
        %s359 = sadd.s32 %s28, %s29
        %p360 = scmp.lt.s32.totalorder %s359, 1
        %s361 = scalar_select %p360, %s359, 1
        %p362 = scmp.eq.s32.totalorder %s29, 0
        // Predicated region
        $region45: #{tpu_custom_call.1} parent=35 // pred_check
          %p363 = pneg %p362
        $region46: #{tpu_custom_call.1} parent=35 // pred_check_branch
          %365 = sbr.rel (%p363) target = $region48
        $region47: #{tpu_custom_call.1} parent=35 // pred_region
          %366 = vst [vmem:[%s335] sm:$0xff] 0.0
        $region48: #{tpu_custom_call.1} parent=35 // pred_fallthru
          _
        %v367 = vld [vmem:[%s342] sm:$0xff]
        %v368 = vld [vmem:[%s283] sm:$0xff]
        %v369 = vld [vmem:[%s292] sm:$0xff]
        %v370 = vld [vmem:[%s358] sm:$0xff]
        %v371 = vsub.f32 %v370, 1.0
        %373 = vset.pattern.permute.xlu0 0
        %374 = vperm.xlu0 %373, %v371
        %v375 = vpop.permute.xlu0 %374
        %v377 = vmul.f32 %v375, %v368
        %v378 = vadd.f32 %v377, 1.0
        %v379 = vsub.f32 0.0, %v367
        %v380 = vmax.f32 %v379, 0.0
        %v381 = vand.u32 2147483647, %v367
        %v382 = vsub.f32 0.0, %v381
        %v383 = vmul.f32 %v382, 1.442695
        %v384 = vpow.pop %v383
        %v385 = vadd.f32 %v384, 1.0
        %v386 = vlog2.pop %v385
        %v387 = vmul.f32 %v386, 0.6931472
        %v388 = vmul.f32 -0.5, %v384
        %v389 = vadd.f32 %v388, 1.0
        %v390 = vmul.f32 %v389, %v384
        %v391 = vand.u32 2147483647, %v384
        %vm392 = vcmp.lt.f32.partialorder %v391, 0.0004427343
        %v393 = vsel %vm392, %v390, %v387
        %v394 = vadd.f32 %v380, %v393
        %v395 = vsub.f32 1.0, %v368
        %v396 = vmul.f32 %v395, %v367
        %v397 = vmul.f32 %v378, %v394
        %v398 = vadd.f32 %v396, %v397
        %v399 = vmul.f32 %v398, %v369
        %v400 = vadd.f32 %v399, 0.0
        %v401 = vld [vmem:[%s335] sm:$0xff]
        %v402 = vadd.f32 %v401, %v400
        %403 = vst [vmem:[%s335] sm:$0xff] %v402
        %s404 = sand.u32 %s172, 1
        %s405 = scalar_lea.sflag [#allocation4], %s404
        %s406 = sand.u32 %s172, 1
        %s407 = smul.addr %s406, 8
        %s408 = scalar_lea.vmem [#allocation7], %s407
        // Predicated region
        $region49: #{tpu_custom_call.1} parent=35 // pred_check
          %p409 = pneg %p182
        $region50: #{tpu_custom_call.1} parent=35 // pred_check_branch
          %411 = sbr.rel (%p409) target = $region52
        $region51: #{tpu_custom_call.1} parent=35 // pred_region
          %s413 = ssub.s32 128, 128
          %414 = vsyncadd %s405, %s413
          %s415 = smul.addr %s28, 128
          %s416 = scalar_lea.hbm %s4, %s415
          %s418 = sshll.u32 %s408, 4
          %s419 = int_to_ptr.vmem [resolvable:$true] %s418
          %421 = dma.vmem_to_hbm [thread:$0]  %s419, 128, %s416, %s405
        $region52: #{tpu_custom_call.1} parent=35 // pred_fallthru
          _
      $region36: #{tpu_custom_call.1} parent=5 // pred_fallthru
        _
      %p422 = scmp.le.s32.totalorder 2, %s19
      // Predicated region
      $region53: #{tpu_custom_call.1} parent=5 // pred_check
        %p423 = pneg %p422
      $region54: #{tpu_custom_call.1} parent=5 // pred_check_branch
        %425 = sbr.rel (%p423) target = $region56
      $region55: #{tpu_custom_call.1} parent=5 // pred_region
        %s426 = ssub.s32 %s19, 2
        // Predicated region
        $region57: #{tpu_custom_call.1} parent=55 // pred_check
          %p427 = pneg %p188
        $region58: #{tpu_custom_call.1} parent=55 // pred_check_branch
          %429 = sbr.rel (%p427) target = $region60
        $region59: #{tpu_custom_call.1} parent=55 // pred_region
          %s430 = sand.u32 %s173, 1
          %s431 = scalar_lea.sflag [#allocation4], %s430
          %s432 = sand.u32 %s173, 1
          %s433 = smul.addr %s432, 8
          %s434 = scalar_lea.vmem [#allocation7], %s433
          %435 = dma.done %s431, 128
        $region60: #{tpu_custom_call.1} parent=55 // pred_fallthru
          _
      $region56: #{tpu_custom_call.1} parent=5 // pred_fallthru
        _
    $region6: #{tpu_custom_call.1} parent=1 // loop_footer
      %s23 = sadd.s32 1, %s19
    $region7: #{tpu_custom_call.1} parent=1 // loop_footer_branch
      %18 = sbr.rel target = $region3
    $region8: #{tpu_custom_call.1} parent=1 // loop_exit
      _
    %436 = vsyncpa [#allocation3], 1
    %s437 = scalar_lea.sflag [#allocation3], 1
    %438 = vsyncpa %s437, 1
    %439 = vsyncpa [#allocation6], 1
    %s440 = scalar_lea.sflag [#allocation6], 1
    %441 = vsyncpa %s440, 1
    %442 = vsyncpa [#allocation4], 1
    %s443 = scalar_lea.sflag [#allocation4], 1
    %444 = vsyncpa %s443, 1

</llo_original>
